<compile_context>
chip_gen: v6e
topology: v6e:2x2x1
jax: 0.10.0
libtpu: 0.0.40
codegen_flags: <defaults>
</compile_context>

<pallas_src>
import jax
import jax.numpy as jnp
from jax.experimental import pallas as pl
from jax.experimental.pallas import tpu as pltpu


def _gate_att_kernel(prot_ref, dbias_ref, w1p_ref, b2_ref, out_ref):
    # prot_ref:  (1, H, T)      protein lane tile (channels on sublanes)
    # dbias_ref: (1, 2H, 1)     per-batch bias = W1[:, :H] @ drug + b1, rows [:H] pre-scaled by w2
    # w1p_ref:   (2H, H)        protein half of W1, rows [:H] pre-scaled by w2
    # b2_ref:    (1,)  (SMEM)   second conv bias
    p = prot_ref[0]                                         # (H, T)
    H = p.shape[0]

    # Conv1d(2H -> 2H, k=1); drug contribution and w2 scaling pre-folded.
    y = jnp.dot(w1p_ref[...], p, preferred_element_type=jnp.float32)
    y = y + dbias_ref[0]                                    # (2H, T) f32

    # GLU gate; in the bf16 I/O regime run sigmoid in bf16 (halves EUP pushes).
    gate = y[H:, :]
    if out_ref.dtype == jnp.bfloat16:
        gate = gate.astype(jnp.bfloat16)
    sig = jax.nn.sigmoid(gate).astype(jnp.float32)          # (H, T)

    # Conv1d(H -> 1, k=1) + Sigmoid; w2 already folded into y[:H].
    z = jnp.sum(y[:H, :] * sig, axis=0, keepdims=True) + b2_ref[0]
    att = jax.nn.sigmoid(z)                                 # (1, T)

    # out = att*p*0.5 + p*0.5 == ((att + 1) * 0.5) * p  (scale the (1,T) row first)
    scale = (att + 1.0) * 0.5
    out_ref[0] = (scale * p).astype(out_ref.dtype)


def _pick_lane_tile(L, max_tile):
    """Largest multiple of 128 that divides L, capped at max_tile (L % 128 == 0)."""
    t = max(128, min(max_tile, L))
    t = max(128, (t // 128) * 128)
    while L % t != 0:
        t -= 128
    return t


def _vmem_limit_bytes(H, T, dtype):
    itemsize = jnp.dtype(dtype).itemsize
    io = 2 * 2 * H * T * itemsize          # protein in + out, double-buffered
    scratch = 3 * (2 * H * T) * 4          # y / gate / temps in f32 (headroom)
    est = io + scratch + (4 << 20)
    # >= 32 MiB so big tiles compile on v5e's 16 MiB default scoped limit;
    # <= 56 MiB so we never ask for more than v7x's 64 MiB physical VMEM.
    return int(min(max(est, 32 << 20), 56 << 20))


def gate_att(drug, protein, w1, b1, w2, b2, *, max_lane_tile=8192):
    B, H, L = protein.shape
    assert drug.shape == (B, H)
    assert w1.shape == (2 * H, 2 * H)
    assert w2.shape == (1, H)

    f32 = jnp.float32
    w1f = w1.astype(f32)
    b1f = b1.reshape(2 * H).astype(f32)
    w2f = w2.reshape(H).astype(f32)
    b2f = b2.reshape(1).astype(f32)

    # ---- cheap wrapper-side preprocessing (O(B*H^2)) ----
    # d_bias[b] = W1[:, :H] @ drug[b] + b1, with rows [:H] pre-scaled by w2.
    d_bias = jnp.einsum('oh,bh->bo', w1f[:, :H], drug.astype(f32)) + b1f[None, :]
    d_bias = jnp.concatenate([d_bias[:, :H] * w2f[None, :], d_bias[:, H:]],
                             axis=1)[:, :, None]                     # (B, 2H, 1) f32
    # Protein half of W1, rows [:H] pre-scaled by w2; cast to activation dtype
    # so the MXU sees bf16 operands when I/O is bf16.
    w1p = w1f[:, H:]
    w1p = jnp.concatenate([w1p[:H] * w2f[:, None], w1p[H:]], axis=0)
    w1p = w1p.astype(protein.dtype)                                  # (2H, H)

    # Pad L to a multiple of 128 so output stores are lane-dense.
    L_pad = ((L + 127) // 128) * 128
    prot = protein if L_pad == L else jnp.pad(
        protein, ((0, 0), (0, 0), (0, L_pad - L)))

    T = _pick_lane_tile(L_pad, max_lane_tile)
    n_lt = L_pad // T

    out = pl.pallas_call(
        _gate_att_kernel,
        out_shape=jax.ShapeDtypeStruct((B, H, L_pad), protein.dtype),
        grid_spec=pltpu.PrefetchScalarGridSpec(
            num_scalar_prefetch=0,
            grid=(B, n_lt),
            in_specs=[
                pl.BlockSpec((1, H, T), lambda b, j: (b, 0, j)),        # protein
                pl.BlockSpec((1, 2 * H, 1), lambda b, j: (b, 0, 0)),    # d_bias
                pl.BlockSpec((2 * H, H), lambda b, j: (0, 0)),          # W1 protein half
                pl.BlockSpec(memory_space=pltpu.MemorySpace.SMEM),      # b2 scalar
            ],
            out_specs=pl.BlockSpec((1, H, T), lambda b, j: (b, 0, j)),
        ),
        compiler_params=pltpu.CompilerParams(
            dimension_semantics=("parallel", "parallel"),
            vmem_limit_bytes=_vmem_limit_bytes(H, T, protein.dtype)),
    )(prot, d_bias, w1p, b2f)

    return out if L_pad == L else out[:, :, :L]


def gate_att_reference(drug, protein, w1, b1, w2, b2):
    B, H, L = protein.shape
    x = jnp.concatenate(
        [jnp.broadcast_to(drug[:, :, None], (B, H, L)), protein], axis=1)
    y = jnp.einsum('oc,bcl->bol', w1, x) + b1.reshape(1, 2 * H, 1)
    glu = y[:, :H, :] * jax.nn.sigmoid(y[:, H:, :])
    att = jax.nn.sigmoid(
        jnp.einsum('oc,bcl->bol', w2, glu) + b2.reshape(1, 1, 1))
    return att * protein * 0.5 + protein * 0.5


if __name__ == "__main__":
    key = jax.random.PRNGKey(0)
    k_drug, k_prot, k_w1, k_b1, k_w2, k_b2 = jax.random.split(key, 6)

    B, H = 2, 32  # hidden_dim = 32

    # att = Conv1d(2H, 2H, 1) -> GLU(dim=1) -> Conv1d(H, 1, 1) -> Sigmoid
    w1 = jax.random.normal(k_w1, (2 * H, 2 * H), jnp.float32) * (1.0 / (2 * H) ** 0.5)
    b1 = jax.random.normal(k_b1, (2 * H, 1), jnp.float32) * 0.05
    w2 = jax.random.normal(k_w2, (1, H), jnp.float32) * (1.0 / H ** 0.5)
    b2 = jax.random.normal(k_b2, (1, 1), jnp.float32) * 0.05

    # (L, activation dtype, max_lane_tile, tolerance):
    #  - large lane-tiled f32 path
    #  - small / ragged L (padded to 128, lane-dense stores)
    #  - bf16 I/O + bf16 MXU + bf16 gate sigmoid (HBM-bound ~2x win, ~1e-2 tol)
    cases = [
        (1024, jnp.float32, 8192, 1e-4),
        (16,   jnp.float32, 8192, 1e-4),
        (2048, jnp.bfloat16, 16384, 5e-2),
    ]
    for L, act_dtype, max_tile, tol in cases:
        drug = jax.random.normal(k_drug, (B, H), jnp.float32).astype(act_dtype)
        protein = jax.random.normal(k_prot, (B, H, L), jnp.float32).astype(act_dtype)

        out = gate_att(drug, protein, w1, b1, w2, b2, max_lane_tile=max_tile)
        jax.block_until_ready(out)

        ref = gate_att_reference(drug.astype(jnp.float32),
                                 protein.astype(jnp.float32), w1, b1, w2, b2)
        assert out.shape == (B, H, L)
        err = float(jnp.max(jnp.abs(out.astype(jnp.float32) - ref)))
        assert err < tol, f"mismatch at L={L}, dtype={act_dtype}: max abs err {err}"

    print("KERNEL_OK")
</pallas_src>

<mosaic_0001>
module attributes {stable_mosaic.version = 11 : i64} {
  func.func @_gate_att_kernel(%arg0: i32, %arg1: i32, %arg2: memref<1x32x1024xf32, #tpu.memory_space<vmem>>, %arg3: memref<1x64x1xf32, #tpu.memory_space<vmem>>, %arg4: memref<64x32xf32, #tpu.memory_space<vmem>>, %arg5: memref<1xf32, #tpu.memory_space<smem>>, %arg6: memref<1x32x1024xf32, #tpu.memory_space<vmem>>) attributes {dimension_semantics = [#tpu.dimension_semantics<parallel>, #tpu.dimension_semantics<parallel>], iteration_bounds = array<i64: 2, 1>, scalar_prefetch = 0 : i64, scratch_operands = 0 : i64, tpu.core_type = #tpu.core_type<tc>, window_params = [{transform_indices = @transform_0, window_bounds = array<i64: 1, 32, 1024>}, {transform_indices = @transform_1, window_bounds = array<i64: 1, 64, 1>}, {pipeline_mode = #tpu.pipeline_mode<synchronous>, transform_indices = @transform_2, window_bounds = array<i64: 64, 32>}, {transform_indices = @transform_3, window_bounds = array<i64: 1>}, {transform_indices = @transform_4, window_bounds = array<i64: 1, 32, 1024>}]} {
    %c0 = arith.constant 0 : index
    %c0_0 = arith.constant 0 : index
    %c0_1 = arith.constant 0 : index
    %0 = vector.load %arg2[%c0, %c0_0, %c0_1] : memref<1x32x1024xf32, #tpu.memory_space<vmem>>, vector<1x32x1024xf32>
    %1 = vector.shape_cast %0 : vector<1x32x1024xf32> to vector<32x1024xf32>
    %c0_2 = arith.constant 0 : index
    %c0_3 = arith.constant 0 : index
    %2 = vector.load %arg4[%c0_2, %c0_3] : memref<64x32xf32, #tpu.memory_space<vmem>>, vector<64x32xf32>
    %cst = arith.constant dense<0.000000e+00> : vector<64x1024xf32>
    %3 = tpu.matmul %2, %1, %cst {dimension_numbers = #tpu.dot_dimension_numbers<[1], [0], [0], [1], [0, 0, 1, 1], [], []>} : vector<64x32xf32>, vector<32x1024xf32>, vector<64x1024xf32> -> vector<64x1024xf32>
    %c0_4 = arith.constant 0 : index
    %c0_5 = arith.constant 0 : index
    %c0_6 = arith.constant 0 : index
    %4 = vector.load %arg3[%c0_4, %c0_5, %c0_6] : memref<1x64x1xf32, #tpu.memory_space<vmem>>, vector<1x64x1xf32>
    %5 = vector.shape_cast %4 : vector<1x64x1xf32> to vector<64x1xf32>
    %6 = vector.broadcast %5 : vector<64x1xf32> to vector<64x1024xf32>
    %7 = arith.addf %3, %6 : vector<64x1024xf32>
    %8 = vector.extract_strided_slice %7 {offsets = [32, 0], sizes = [32, 1024], strides = [1, 1]} : vector<64x1024xf32> to vector<32x1024xf32>
    %9 = arith.negf %8 : vector<32x1024xf32>
    %10 = math.exp %9 : vector<32x1024xf32>
    %cst_7 = arith.constant 1.000000e+00 : f32
    %11 = vector.broadcast %cst_7 : f32 to vector<32x1024xf32>
    %12 = arith.addf %11, %10 : vector<32x1024xf32>
    %13 = arith.divf %11, %12 : vector<32x1024xf32>
    %14 = vector.extract_strided_slice %7 {offsets = [0, 0], sizes = [32, 1024], strides = [1, 1]} : vector<64x1024xf32> to vector<32x1024xf32>
    %15 = arith.mulf %14, %13 : vector<32x1024xf32>
    %cst_8 = arith.constant dense<0.000000e+00> : vector<1024xf32>
    %16 = vector.multi_reduction <add>, %15, %cst_8 [0] : vector<32x1024xf32> to vector<1024xf32>
    %17 = vector.shape_cast %16 : vector<1024xf32> to vector<1x1024xf32>
    %c0_9 = arith.constant 0 : index
    %18 = memref.load %arg5[%c0_9] : memref<1xf32, #tpu.memory_space<smem>>
    %19 = vector.broadcast %18 : f32 to vector<1x1024xf32>
    %20 = arith.addf %17, %19 : vector<1x1024xf32>
    %21 = arith.negf %20 : vector<1x1024xf32>
    %22 = math.exp %21 : vector<1x1024xf32>
    %cst_10 = arith.constant 1.000000e+00 : f32
    %23 = vector.broadcast %cst_10 : f32 to vector<1x1024xf32>
    %24 = arith.addf %23, %22 : vector<1x1024xf32>
    %25 = arith.divf %23, %24 : vector<1x1024xf32>
    %cst_11 = arith.constant 1.000000e+00 : f32
    %26 = vector.broadcast %cst_11 : f32 to vector<1x1024xf32>
    %27 = arith.addf %25, %26 : vector<1x1024xf32>
    %cst_12 = arith.constant 5.000000e-01 : f32
    %28 = vector.broadcast %cst_12 : f32 to vector<1x1024xf32>
    %29 = arith.mulf %27, %28 : vector<1x1024xf32>
    %30 = vector.broadcast %29 : vector<1x1024xf32> to vector<32x1024xf32>
    %31 = arith.mulf %30, %1 : vector<32x1024xf32>
    %c0_13 = arith.constant 0 : index
    %c0_14 = arith.constant 0 : index
    %c0_15 = arith.constant 0 : index
    %32 = vector.load %arg6[%c0_13, %c0_14, %c0_15] : memref<1x32x1024xf32, #tpu.memory_space<vmem>>, vector<1x32x1024xf32>
    %33 = vector.shape_cast %32 : vector<1x32x1024xf32> to vector<32x1024xf32>
    %34 = vector.shape_cast %31 : vector<32x1024xf32> to vector<1x32x1024xf32>
    tpu.vector_store %arg6[%c0_13, %c0_14, %c0_15], %34 {strides = array<i32>} : memref<1x32x1024xf32, #tpu.memory_space<vmem>>, vector<1x32x1024xf32>,
    return
  }
  func.func @transform_0(%arg0: i32, %arg1: i32) -> (i32, i32, i32) {
    %c0_i32 = arith.constant 0 : i32
    %c0_i32_0 = arith.constant 0 : i32
    return %arg0, %c0_i32, %arg1 : i32, i32, i32
  }
  func.func @transform_1(%arg0: i32, %arg1: i32) -> (i32, i32, i32) {
    %c0_i32 = arith.constant 0 : i32
    %c0_i32_0 = arith.constant 0 : i32
    %c0_i32_1 = arith.constant 0 : i32
    return %arg0, %c0_i32, %c0_i32_0 : i32, i32, i32
  }
  func.func @transform_2(%arg0: i32, %arg1: i32) -> (i32, i32) {
    %c0_i32 = arith.constant 0 : i32
    %c0_i32_0 = arith.constant 0 : i32
    %c0_i32_1 = arith.constant 0 : i32
    return %c0_i32, %c0_i32_0 : i32, i32
  }
  func.func @transform_3(%arg0: i32, %arg1: i32) -> i32 {
    %c0_i32 = arith.constant 0 : i32
    %c0_i32_0 = arith.constant 0 : i32
    return %c0_i32 : i32
  }
  func.func @transform_4(%arg0: i32, %arg1: i32) -> (i32, i32, i32) {
    %c0_i32 = arith.constant 0 : i32
    %c0_i32_0 = arith.constant 0 : i32
    return %arg0, %c0_i32, %arg1 : i32, i32, i32
  }
}

</mosaic_0001>

<llo_original>
// kernel: tpu_custom_call.1
$region0: #{tpu_custom_call.1}
  #allocation0 [shape = 'u32[]', space=smem, size = 0x4, offset = 0x4, fixed_abs, tag = 'smem constant byte address 0x4 - core index']
  #allocation1 [shape = 'u32[144,128]{1,0:T(1,128)}', space=vmem, size = 0x12000, scoped, tag = 'internal scratch']
  #allocation2 [shape = 'f32[1]{0:T(128)S(6)}', space=smem, size = 0x200, scoped, tag = 'scoped memory for tpu_custom_call.1']
  %s0 = inlined_call_operand.hbm [shape: f32[2,32,1024], index: 0, kind: input, shape index: {}]
  %s1 = inlined_call_operand.vmem [shape: f32[2,64,1], index: 1, kind: input, shape index: {}]
  %s2 = inlined_call_operand.vmem [shape: f32[64,32], index: 2, kind: input, shape index: {}]
  %s3 = inlined_call_operand.<no memory space> [shape: f32[1], index: 3, kind: input, shape index: {}]
  %s4 = inlined_call_operand.hbm [shape: f32[2,32,1024], index: 4, kind: output, shape index: {}]
  %s5 = sld [smem:[#allocation0]]
  $region53: #{tpu_custom_call.1} parent=0
    _
  %s7 = ssub.s32 1, %s5
  %s8 = scalar_select 0, %s7, %s5
  %9 = sst [smem:[#allocation2]] %s3
  $region1: #{tpu_custom_call.1} parent=0
    #allocation3 [shape = 'u8[262144]{0}', space=vmem, size = 0x40000, scoped, tag = 'input window, operand 0']
    #allocation4 [shape = 's32[2]{0}', space=sflag, size = 0x8, scoped, tag = 'scoped memory for tpu_custom_call.1']
    #allocation5 [shape = 's32[2]{0}', space=sflag, size = 0x8, scoped, tag = 'scoped memory for tpu_custom_call.1']
    #allocation6 [shape = 'u8[262144]{0}', space=vmem, size = 0x40000, scoped, tag = 'output window, operand 0']
    %10 = vsyncpa [#allocation4], 0
    %s11 = scalar_lea.sflag [#allocation4], 1
    %12 = vsyncpa %s11, 0
    %13 = vsyncpa [#allocation5], 0
    %s14 = scalar_lea.sflag [#allocation5], 1
    %15 = vsyncpa %s14, 0
    loop: start=0, step=1, limit=4
    $region2: #{tpu_custom_call.1} parent=1 // loop_pre_header
      _
    $region3: #{tpu_custom_call.1} parent=1 // loop_header
      %s17 = sphi 0, %s21
      %p18 = scmp.ge.s32.totalorder %s17, 4
      %s24 = sphi 0, %s36
      %s25 = sphi 0, %s32
      %s26 = sphi 0, %s24
      %s27 = sphi 0, %s25
      %s28 = sphi 0, %s26
      %s29 = sphi 0, %s27
      %s41 = sphi 0, %s43
      %s44 = sphi 0, %s41
      %s45 = sphi 0, %s44
      %s61 = sphi 0, %s45
      %s67 = sphi 0, %s69
      %s70 = sphi 0, %s67
      %s71 = sphi 0, %s70
      %s87 = sphi 0, %s71
      %s91 = sphi 0, %s91
      %s93 = sphi 0, %s91
      %s94 = sphi 0, %s93
      %s108 = sphi 0, %s94
      %s112 = sphi 0, %s112
      %s114 = sphi 0, %s112
      %s115 = sphi 0, %s114
      %s129 = sphi 0, %s115
      %s137 = sphi 0, %s139
      %s140 = sphi 0, %s137
      %s141 = sphi 0, %s140
      %s157 = sphi 0, %s141
    $region4: #{tpu_custom_call.1} parent=1 // loop_header_branch
      %20 = sbr.rel (%p18) target = $region8
    $region5: #{tpu_custom_call.1} parent=1 // loop_body
      %s22 = ssub.s32 %s17, 1
      %s23 = ssub.s32 %s17, 2
      %s30 = sadd.s32 1, %s25
      %p31 = scmp.ge.s32.totalorder %s30, 1
      %s32 = scalar_select %p31, 0, %s30
      %s33 = sadd.s32 1, %s24
      %s34 = scalar_select %p31, %s33, %s24
      %p35 = scmp.ge.s32.totalorder %s34, 2
      %s36 = scalar_select %p35, 0, %s34
      %s37 = ssub.s32 %s24, %s36
      %s38 = ssub.s32 %s25, %s32
      %s39 = sor.u32 %s37, %s38
      %p40 = scmp.eq.s32.totalorder %s39, 0
      %s42 = sadd.s32 %s41, 1
      %s43 = scalar_select %p40, %s41, %s42
      %p46 = pneg %p40
      %p47 = scmp.eq.s32.totalorder %s17, 1
      %p48 = por %p46, %p47
      %p49 = scmp.ne.s32.totalorder %s41, %s44
      %p50 = scmp.eq.s32.totalorder %s17, 0
      %p51 = por %p49, %p50
      %p52 = scmp.ne.s32.totalorder %s41, %s44
      %p53 = scmp.eq.s32.totalorder %s22, 1
      %p54 = por %p52, %p53
      %p55 = scmp.ne.s32.totalorder %s44, %s45
      %p56 = scmp.eq.s32.totalorder %s22, 0
      %p57 = por %p55, %p56
      %p58 = scmp.ne.s32.totalorder %s44, %s45
      %p59 = scmp.eq.s32.totalorder %s23, 1
      %p60 = por %p58, %p59
      %p62 = scmp.ne.s32.totalorder %s45, %s61
      %p63 = scmp.eq.s32.totalorder %s23, 0
      %p64 = por %p62, %p63
      %s65 = ssub.s32 %s24, %s36
      %p66 = scmp.eq.s32.totalorder %s65, 0
      %s68 = sadd.s32 %s67, 1
      %s69 = scalar_select %p66, %s67, %s68
      %p72 = pneg %p66
      %p73 = scmp.eq.s32.totalorder %s17, 1
      %p74 = por %p72, %p73
      %p75 = scmp.ne.s32.totalorder %s67, %s70
      %p76 = scmp.eq.s32.totalorder %s17, 0
      %p77 = por %p75, %p76
      %p78 = scmp.ne.s32.totalorder %s67, %s70
      %p79 = scmp.eq.s32.totalorder %s22, 1
      %p80 = por %p78, %p79
      %p81 = scmp.ne.s32.totalorder %s70, %s71
      %p82 = scmp.eq.s32.totalorder %s22, 0
      %p83 = por %p81, %p82
      %p84 = scmp.ne.s32.totalorder %s70, %s71
      %p85 = scmp.eq.s32.totalorder %s23, 1
      %p86 = por %p84, %p85
      %p88 = scmp.ne.s32.totalorder %s71, %s87
      %p89 = scmp.eq.s32.totalorder %s23, 0
      %p90 = por %p88, %p89
      %s92 = sadd.s32 %s91, 1
      %p95 = scmp.eq.s32.totalorder %s17, 1
      %p96 = scmp.ne.s32.totalorder %s91, %s93
      %p97 = scmp.eq.s32.totalorder %s17, 0
      %p98 = por %p96, %p97
      %p99 = scmp.ne.s32.totalorder %s91, %s93
      %p100 = scmp.eq.s32.totalorder %s22, 1
      %p101 = por %p99, %p100
      %p102 = scmp.ne.s32.totalorder %s93, %s94
      %p103 = scmp.eq.s32.totalorder %s22, 0
      %p104 = por %p102, %p103
      %p105 = scmp.ne.s32.totalorder %s93, %s94
      %p106 = scmp.eq.s32.totalorder %s23, 1
      %p107 = por %p105, %p106
      %p109 = scmp.ne.s32.totalorder %s94, %s108
      %p110 = scmp.eq.s32.totalorder %s23, 0
      %p111 = por %p109, %p110
      %s113 = sadd.s32 %s112, 1
      %p116 = scmp.eq.s32.totalorder %s17, 1
      %p117 = scmp.ne.s32.totalorder %s112, %s114
      %p118 = scmp.eq.s32.totalorder %s17, 0
      %p119 = por %p117, %p118
      %p120 = scmp.ne.s32.totalorder %s112, %s114
      %p121 = scmp.eq.s32.totalorder %s22, 1
      %p122 = por %p120, %p121
      %p123 = scmp.ne.s32.totalorder %s114, %s115
      %p124 = scmp.eq.s32.totalorder %s22, 0
      %p125 = por %p123, %p124
      %p126 = scmp.ne.s32.totalorder %s114, %s115
      %p127 = scmp.eq.s32.totalorder %s23, 1
      %p128 = por %p126, %p127
      %p130 = scmp.ne.s32.totalorder %s115, %s129
      %p131 = scmp.eq.s32.totalorder %s23, 0
      %p132 = por %p130, %p131
      %s133 = ssub.s32 %s24, %s36
      %s134 = ssub.s32 %s25, %s32
      %s135 = sor.u32 %s133, %s134
      %p136 = scmp.eq.s32.totalorder %s135, 0
      %s138 = sadd.s32 %s137, 1
      %s139 = scalar_select %p136, %s137, %s138
      %p142 = pneg %p136
      %p143 = scmp.eq.s32.totalorder %s17, 1
      %p144 = por %p142, %p143
      %p145 = scmp.ne.s32.totalorder %s137, %s140
      %p146 = scmp.eq.s32.totalorder %s17, 0
      %p147 = por %p145, %p146
      %p148 = scmp.ne.s32.totalorder %s137, %s140
      %p149 = scmp.eq.s32.totalorder %s22, 1
      %p150 = por %p148, %p149
      %p151 = scmp.ne.s32.totalorder %s140, %s141
      %p152 = scmp.eq.s32.totalorder %s22, 0
      %p153 = por %p151, %p152
      %p154 = scmp.ne.s32.totalorder %s140, %s141
      %p155 = scmp.eq.s32.totalorder %s23, 1
      %p156 = por %p154, %p155
      %p158 = scmp.ne.s32.totalorder %s141, %s157
      %p159 = scmp.eq.s32.totalorder %s23, 0
      %p160 = por %p158, %p159
      %p161 = scmp.le.s32.totalorder 1, %s17
      %p162 = scmp.lt.s32.totalorder %s17, 3
      %p163 = pnand %p161, %p162
      %p164 = pneg %p163
      // Predicated region
      $region9: #{tpu_custom_call.1} parent=5 // pred_check
        _
      $region10: #{tpu_custom_call.1} parent=5 // pred_check_branch
        %166 = sbr.rel (%p163) target = $region12
      $region11: #{tpu_custom_call.1} parent=5 // pred_region
        %s167 = ssub.s32 %s17, 1
        // Predicated region
        $region13: #{tpu_custom_call.1} parent=11 // pred_check
          %p168 = pneg %p104
        $region14: #{tpu_custom_call.1} parent=11 // pred_check_branch
          %170 = sbr.rel (%p168) target = $region16
        $region15: #{tpu_custom_call.1} parent=11 // pred_region
          _
        $region16: #{tpu_custom_call.1} parent=11 // pred_fallthru
          _
        // Predicated region
        $region17: #{tpu_custom_call.1} parent=11 // pred_check
          %p171 = pneg %p125
        $region18: #{tpu_custom_call.1} parent=11 // pred_check_branch
          %173 = sbr.rel (%p171) target = $region20
        $region19: #{tpu_custom_call.1} parent=11 // pred_region
          _
        $region20: #{tpu_custom_call.1} parent=11 // pred_fallthru
          _
      $region12: #{tpu_custom_call.1} parent=5 // pred_fallthru
        _
      %p174 = scmp.lt.s32.totalorder %s17, 2
      // Predicated region
      $region21: #{tpu_custom_call.1} parent=5 // pred_check
        %p175 = pneg %p174
      $region22: #{tpu_custom_call.1} parent=5 // pred_check_branch
        %177 = sbr.rel (%p175) target = $region24
      $region23: #{tpu_custom_call.1} parent=5 // pred_region
        // Predicated region
        $region25: #{tpu_custom_call.1} parent=23 // pred_check
          %p178 = pneg %p51
        $region26: #{tpu_custom_call.1} parent=23 // pred_check_branch
          %180 = sbr.rel (%p178) target = $region28
        $region27: #{tpu_custom_call.1} parent=23 // pred_region
          %s181 = sand.u32 %s41, 1
          %s182 = scalar_lea.sflag [#allocation4], %s181
          %s183 = sand.u32 %s41, 1
          %s184 = smul.addr %s183, 256
          %s185 = scalar_lea.vmem [#allocation3], %s184
          %s186 = smul.u32 8, %s25
          %s188 = ssub.s32 4096, 4096
          %189 = vsyncadd %s182, %s188
          %s190 = smul.addr %s24, 32
          %s191 = sadd.s32 %s186, %s190
          %s192 = smul.addr %s191, 128
          %s193 = scalar_lea.hbm %s0, %s192
          %s194 = sshll.u32 %s185, 4
          %s195 = int_to_ptr.vmem [resolvable:$true] %s194
          %200 = dma.hbm_to_vmem [thread:$0]  %s193, 4096, %s195, %s182, 1024, 1024, 64
        $region28: #{tpu_custom_call.1} parent=23 // pred_fallthru
          _
        // Predicated region
        $region29: #{tpu_custom_call.1} parent=23 // pred_check
          %p201 = pneg %p77
        $region30: #{tpu_custom_call.1} parent=23 // pred_check_branch
          %203 = sbr.rel (%p201) target = $region32
        $region31: #{tpu_custom_call.1} parent=23 // pred_region
          %p204 = scmp.lt.s32.totalorder %s24, 1
          %s205 = scalar_select %p204, %s24, 1
          %s206 = smul.addr %s205, 8
          %s207 = smul.addr %s206, 8
          %s208 = scalar_lea.vmem %s1, %s207
        $region32: #{tpu_custom_call.1} parent=23 // pred_fallthru
          _
      $region24: #{tpu_custom_call.1} parent=5 // pred_fallthru
        _
      %p209 = scmp.le.s32.totalorder 1, %s17
      %p210 = scmp.lt.s32.totalorder %s17, 3
      %p211 = pnand %p209, %p210
      %p212 = pneg %p211
      // Predicated region
      $region33: #{tpu_custom_call.1} parent=5 // pred_check
        _
      $region34: #{tpu_custom_call.1} parent=5 // pred_check_branch
        %214 = sbr.rel (%p211) target = $region36
      $region35: #{tpu_custom_call.1} parent=5 // pred_region
        %s215 = ssub.s32 %s17, 1
        %s216 = sand.u32 %s44, 1
        %s217 = scalar_lea.sflag [#allocation4], %s216
        %s218 = sand.u32 %s44, 1
        %s219 = smul.addr %s218, 256
        %s220 = scalar_lea.vmem [#allocation3], %s219
        // Predicated region
        $region37: #{tpu_custom_call.1} parent=35 // pred_check
          %p221 = pneg %p57
        $region38: #{tpu_custom_call.1} parent=35 // pred_check_branch
          %223 = sbr.rel (%p221) target = $region40
        $region39: #{tpu_custom_call.1} parent=35 // pred_region
          %224 = dma.done %s217, 4096
        $region40: #{tpu_custom_call.1} parent=35 // pred_fallthru
          _
        %s225 = sand.u32 %s44, 1
        %s226 = scalar_lea.sflag [#allocation4], %s225
        %s227 = sand.u32 %s44, 1
        %s228 = smul.addr %s227, 256
        %s229 = scalar_lea.vmem [#allocation3], %s228
        %p230 = pneg %p57
        %p231 = pneg %p54
        %p232 = scmp.lt.s32.totalorder %s26, 1
        %s233 = scalar_select %p232, %s26, 1
        %s234 = smul.addr %s233, 8
        %s235 = smul.addr %s234, 8
        %s236 = scalar_lea.vmem %s1, %s235
        %p237 = pneg %p83
        %p238 = pneg %p80
        %p239 = pneg %p104
        %p240 = pneg %p101
        %p241 = pneg %p125
        %p242 = pneg %p122
        %p243 = pneg %p153
        %p244 = pneg %p150
        %s245 = sand.u32 %s140, 1
        %s246 = scalar_lea.sflag [#allocation5], %s245
        %s247 = sand.u32 %s140, 1
        %s248 = smul.addr %s247, 256
        %s249 = scalar_lea.vmem [#allocation6], %s248
        %s250 = smul.u32 8, %s27
        %p251 = scmp.lt.s32.totalorder %s26, 1
        %s252 = scalar_select %p251, %s26, 1
        %s253 = smul.addr %s252, 8
        %s254 = smul.addr %s253, 8
        %s255 = scalar_lea.vmem %s1, %s254
        %s256 = smul.u32 8, %s27
        %v257 = vld [vmem:[%s220] sm:$0xff]
        %v258 = vld [vmem:[%s220 + $0x8] sm:$0xff]
        %v259 = vld [vmem:[%s220 + $0x10] sm:$0xff]
        %v260 = vld [vmem:[%s220 + $0x18] sm:$0xff]
        %v261 = vld [vmem:[%s220 + $0x20] sm:$0xff]
        %v262 = vld [vmem:[%s220 + $0x28] sm:$0xff]
        %v263 = vld [vmem:[%s220 + $0x30] sm:$0xff]
        %v264 = vld [vmem:[%s220 + $0x38] sm:$0xff]
        %v265 = vld [vmem:[%s220 + $0x40] sm:$0xff]
        %v266 = vld [vmem:[%s220 + $0x48] sm:$0xff]
        %v267 = vld [vmem:[%s220 + $0x50] sm:$0xff]
        %v268 = vld [vmem:[%s220 + $0x58] sm:$0xff]
        %v269 = vld [vmem:[%s220 + $0x60] sm:$0xff]
        %v270 = vld [vmem:[%s220 + $0x68] sm:$0xff]
        %v271 = vld [vmem:[%s220 + $0x70] sm:$0xff]
        %v272 = vld [vmem:[%s220 + $0x78] sm:$0xff]
        %v273 = vld [vmem:[%s220 + $0x80] sm:$0xff]
        %v274 = vld [vmem:[%s220 + $0x88] sm:$0xff]
        %v275 = vld [vmem:[%s220 + $0x90] sm:$0xff]
        %v276 = vld [vmem:[%s220 + $0x98] sm:$0xff]
        %v277 = vld [vmem:[%s220 + $0xa0] sm:$0xff]
        %v278 = vld [vmem:[%s220 + $0xa8] sm:$0xff]
        %v279 = vld [vmem:[%s220 + $0xb0] sm:$0xff]
        %v280 = vld [vmem:[%s220 + $0xb8] sm:$0xff]
        %v281 = vld [vmem:[%s220 + $0xc0] sm:$0xff]
        %v282 = vld [vmem:[%s220 + $0xc8] sm:$0xff]
        %v283 = vld [vmem:[%s220 + $0xd0] sm:$0xff]
        %v284 = vld [vmem:[%s220 + $0xd8] sm:$0xff]
        %v285 = vld [vmem:[%s220 + $0xe0] sm:$0xff]
        %v286 = vld [vmem:[%s220 + $0xe8] sm:$0xff]
        %v287 = vld [vmem:[%s220 + $0xf0] sm:$0xff]
        %v288 = vld [vmem:[%s220 + $0xf8] sm:$0xff]
        %v289 = vld [vmem:[%s2] sm:$0xff]
        %v290 = vld [vmem:[%s2 + $0x8] sm:$0xff]
        %v291 = vld [vmem:[%s2 + $0x10] sm:$0xff]
        %v292 = vld [vmem:[%s2 + $0x18] sm:$0xff]
        %v293 = vld [vmem:[%s2 + $0x20] sm:$0xff]
        %v294 = vld [vmem:[%s2 + $0x28] sm:$0xff]
        %v295 = vld [vmem:[%s2 + $0x30] sm:$0xff]
        %v296 = vld [vmem:[%s2 + $0x38] sm:$0xff]
        %v297 = vld [vmem:[%s255] sm:$0xff]
        %v298 = vld [vmem:[%s255 + $0x8] sm:$0xff]
        %v299 = vld [vmem:[%s255 + $0x10] sm:$0xff]
        %v300 = vld [vmem:[%s255 + $0x18] sm:$0xff]
        %v301 = vld [vmem:[%s255 + $0x20] sm:$0xff]
        %v302 = vld [vmem:[%s255 + $0x28] sm:$0xff]
        %v303 = vld [vmem:[%s255 + $0x30] sm:$0xff]
        %v304 = vld [vmem:[%s255 + $0x38] sm:$0xff]
        %306 = vset.pattern.permute.xlu0 0
        %307 = vperm.xlu0 %306, %v297
        %v308 = vpop.permute.xlu0 %307
        %311 = vset.pattern.permute.xlu0 0
        %312 = vperm.xlu0 %311, %v298
        %v313 = vpop.permute.xlu0 %312
        %316 = vset.pattern.permute.xlu0 0
        %317 = vperm.xlu0 %316, %v299
        %v318 = vpop.permute.xlu0 %317
        %321 = vset.pattern.permute.xlu0 0
        %322 = vperm.xlu0 %321, %v300
        %v323 = vpop.permute.xlu0 %322
        %326 = vset.pattern.permute.xlu0 0
        %327 = vperm.xlu0 %326, %v301
        %v328 = vpop.permute.xlu0 %327
        %331 = vset.pattern.permute.xlu0 0
        %332 = vperm.xlu0 %331, %v302
        %v333 = vpop.permute.xlu0 %332
        %336 = vset.pattern.permute.xlu0 0
        %337 = vperm.xlu0 %336, %v303
        %v338 = vpop.permute.xlu0 %337
        %341 = vset.pattern.permute.xlu0 0
        %342 = vperm.xlu0 %341, %v304
        %v343 = vpop.permute.xlu0 %342
        %vm345 = vcmask 261120
        %v347 = vsel %vm345, %v289, 0
        %v350 = vsel %vm345, %v290, 0
        %v353 = vsel %vm345, %v291, 0
        %v356 = vsel %vm345, %v292, 0
        %v359 = vsel %vm345, %v293, 0
        %v362 = vsel %vm345, %v294, 0
        %v365 = vsel %vm345, %v295, 0
        %v368 = vsel %vm345, %v296, 0
        %370 = vmatprep.subr.mxu0 0.0
        %371 = vmatpush1.msra.mxu0 0.0
        %372 = vmatprep.subr.mxu0 0.0
        %373 = vmatpush1.msra.mxu0 0.0
        %374 = vmatprep.subr.mxu0 0.0
        %375 = vmatpush1.msra.mxu0 0.0
        %376 = vmatprep.subr.mxu0 0.0
        %377 = vmatpush1.msra.mxu0 0.0
        %378 = vmatprep.subr.mxu0 0.0
        %379 = vmatpush1.msra.mxu0 0.0
        %380 = vmatprep.subr.mxu0 0.0
        %381 = vmatpush1.msra.mxu0 0.0
        %382 = vmatprep.subr.mxu0 0.0
        %383 = vmatpush1.msra.mxu0 0.0
        %384 = vmatprep.subr.mxu0 0.0
        %385 = vmatpush1.msra.mxu0 0.0
        %386 = vmatprep.subr.mxu0 0.0
        %387 = vmatpush1.msra.mxu0 0.0
        %388 = vmatprep.subr.mxu0 0.0
        %389 = vmatpush1.msra.mxu0 0.0
        %390 = vmatprep.subr.mxu0 0.0
        %391 = vmatpush1.msra.mxu0 0.0
        %392 = vmatprep.subr.mxu0 0.0
        %393 = vmatpush1.msra.mxu0 0.0
        %394 = vmatprep.subr.mxu0 %v282
        %395 = vmatpush1.msra.mxu0 %v281
        %396 = vmatprep.subr.mxu0 %v274
        %397 = vmatpush1.msra.mxu0 %v273
        %398 = vmatprep.subr.mxu0 %v266
        %399 = vmatpush1.msra.mxu0 %v265
        %400 = vmatprep.subr.mxu0 %v258
        %401 = vmatpush1.msra.mxu0 %v257
        %402 = vmatprep.subr.mxu0 0.0
        %403 = vmatpush2.msra.mxu0 0.0
        %404 = vmatprep.subr.mxu0 0.0
        %405 = vmatpush2.msra.mxu0 0.0
        %406 = vmatprep.subr.mxu0 0.0
        %407 = vmatpush2.msra.mxu0 0.0
        %408 = vmatprep.subr.mxu0 0.0
        %409 = vmatpush2.msra.mxu0 0.0
        %410 = vmatprep.subr.mxu0 0.0
        %411 = vmatpush2.msra.mxu0 0.0
        %412 = vmatprep.subr.mxu0 0.0
        %413 = vmatpush2.msra.mxu0 0.0
        %414 = vmatprep.subr.mxu0 0.0
        %415 = vmatpush2.msra.mxu0 0.0
        %416 = vmatprep.subr.mxu0 0.0
        %417 = vmatpush2.msra.mxu0 0.0
        %418 = vmatprep.subr.mxu0 0.0
        %419 = vmatpush2.msra.mxu0 0.0
        %420 = vmatprep.subr.mxu0 0.0
        %421 = vmatpush2.msra.mxu0 0.0
        %422 = vmatprep.subr.mxu0 0.0
        %423 = vmatpush2.msra.mxu0 0.0
        %424 = vmatprep.subr.mxu0 0.0
        %425 = vmatpush2.msra.mxu0 0.0
        %426 = vmatprep.subr.mxu0 0.0
        %427 = vmatpush2.msra.mxu0 0.0
        %428 = vmatprep.subr.mxu0 0.0
        %429 = vmatpush2.msra.mxu0 0.0
        %430 = vmatprep.subr.mxu0 0.0
        %431 = vmatpush2.msra.mxu0 0.0
        %432 = vmatprep.subr.mxu0 0.0
        %433 = vmatpush2.msra.mxu0 0.0
        %434 = vmatprep.mubr.f32.mxu0 0.0
        %435 = vmatmul.mubr.f32.gmra.mxu0 %v347
        %v436 = vpop.f32.mrf.mxu0
        %v437 = vadd.f32 %v308, %v436
        %v438 = vpop.f32.mrf.mxu0
        %v439 = vadd.f32 %v308, %v438
        %440 = vmatprep.mubr.f32.mxu0 0.0
        %441 = vmatmul.mubr.f32.gmra.mxu0 %v350
        %v442 = vpop.f32.mrf.mxu0
        %v443 = vadd.f32 %v313, %v442
        %v444 = vpop.f32.mrf.mxu0
        %v445 = vadd.f32 %v313, %v444
        %446 = vmatprep.mubr.f32.mxu0 0.0
        %447 = vmatmul.mubr.f32.gmra.mxu0 %v353
        %v448 = vpop.f32.mrf.mxu0
        %v449 = vadd.f32 %v318, %v448
        %v450 = vpop.f32.mrf.mxu0
        %v451 = vadd.f32 %v318, %v450
        %452 = vmatprep.mubr.f32.mxu0 0.0
        %453 = vmatmul.mubr.f32.gmra.mxu0 %v356
        %v454 = vpop.f32.mrf.mxu0
        %v455 = vadd.f32 %v323, %v454
        %v456 = vpop.f32.mrf.mxu0
        %v457 = vadd.f32 %v323, %v456
        %458 = vmatprep.mubr.f32.mxu0 0.0
        %459 = vmatmul.mubr.f32.gmra.mxu0 %v359
        %v460 = vpop.f32.mrf.mxu0
        %v461 = vadd.f32 %v328, %v460
        %v462 = vpop.f32.mrf.mxu0
        %v463 = vadd.f32 %v328, %v462
        %464 = vmatprep.mubr.f32.mxu0 0.0
        %465 = vmatmul.mubr.f32.gmra.mxu0 %v362
        %v466 = vpop.f32.mrf.mxu0
        %v467 = vadd.f32 %v333, %v466
        %v468 = vpop.f32.mrf.mxu0
        %v469 = vadd.f32 %v333, %v468
        %470 = vmatprep.mubr.f32.mxu0 0.0
        %471 = vmatmul.mubr.f32.gmra.mxu0 %v365
        %v472 = vpop.f32.mrf.mxu0
        %v473 = vadd.f32 %v338, %v472
        %v474 = vpop.f32.mrf.mxu0
        %v475 = vadd.f32 %v338, %v474
        %476 = vmatprep.mubr.f32.mxu0 0.0
        %477 = vmatmul.mubr.f32.gmra.mxu0 %v368
        %v478 = vpop.f32.mrf.mxu0
        %v479 = vadd.f32 %v343, %v478
        %v480 = vpop.f32.mrf.mxu0
        %v481 = vadd.f32 %v343, %v480
        %482 = vdwg.mxu0
        %483 = vmatprep.subr.mxu0 0.0
        %484 = vmatpush1.msra.mxu0 0.0
        %485 = vmatprep.subr.mxu0 0.0
        %486 = vmatpush1.msra.mxu0 0.0
        %487 = vmatprep.subr.mxu0 0.0
        %488 = vmatpush1.msra.mxu0 0.0
        %489 = vmatprep.subr.mxu0 0.0
        %490 = vmatpush1.msra.mxu0 0.0
        %491 = vmatprep.subr.mxu0 0.0
        %492 = vmatpush1.msra.mxu0 0.0
        %493 = vmatprep.subr.mxu0 0.0
        %494 = vmatpush1.msra.mxu0 0.0
        %495 = vmatprep.subr.mxu0 0.0
        %496 = vmatpush1.msra.mxu0 0.0
        %497 = vmatprep.subr.mxu0 0.0
        %498 = vmatpush1.msra.mxu0 0.0
        %499 = vmatprep.subr.mxu0 0.0
        %500 = vmatpush1.msra.mxu0 0.0
        %501 = vmatprep.subr.mxu0 0.0
        %502 = vmatpush1.msra.mxu0 0.0
        %503 = vmatprep.subr.mxu0 0.0
        %504 = vmatpush1.msra.mxu0 0.0
        %505 = vmatprep.subr.mxu0 0.0
        %506 = vmatpush1.msra.mxu0 0.0
        %507 = vmatprep.subr.mxu0 %v284
        %508 = vmatpush1.msra.mxu0 %v283
        %509 = vmatprep.subr.mxu0 %v276
        %510 = vmatpush1.msra.mxu0 %v275
        %511 = vmatprep.subr.mxu0 %v268
        %512 = vmatpush1.msra.mxu0 %v267
        %513 = vmatprep.subr.mxu0 %v260
        %514 = vmatpush1.msra.mxu0 %v259
        %515 = vmatprep.subr.mxu0 0.0
        %516 = vmatpush2.msra.mxu0 0.0
        %517 = vmatprep.subr.mxu0 0.0
        %518 = vmatpush2.msra.mxu0 0.0
        %519 = vmatprep.subr.mxu0 0.0
        %520 = vmatpush2.msra.mxu0 0.0
        %521 = vmatprep.subr.mxu0 0.0
        %522 = vmatpush2.msra.mxu0 0.0
        %523 = vmatprep.subr.mxu0 0.0
        %524 = vmatpush2.msra.mxu0 0.0
        %525 = vmatprep.subr.mxu0 0.0
        %526 = vmatpush2.msra.mxu0 0.0
        %527 = vmatprep.subr.mxu0 0.0
        %528 = vmatpush2.msra.mxu0 0.0
        %529 = vmatprep.subr.mxu0 0.0
        %530 = vmatpush2.msra.mxu0 0.0
        %531 = vmatprep.subr.mxu0 0.0
        %532 = vmatpush2.msra.mxu0 0.0
        %533 = vmatprep.subr.mxu0 0.0
        %534 = vmatpush2.msra.mxu0 0.0
        %535 = vmatprep.subr.mxu0 0.0
        %536 = vmatpush2.msra.mxu0 0.0
        %537 = vmatprep.subr.mxu0 0.0
        %538 = vmatpush2.msra.mxu0 0.0
        %539 = vmatprep.subr.mxu0 0.0
        %540 = vmatpush2.msra.mxu0 0.0
        %541 = vmatprep.subr.mxu0 0.0
        %542 = vmatpush2.msra.mxu0 0.0
        %543 = vmatprep.subr.mxu0 0.0
        %544 = vmatpush2.msra.mxu0 0.0
        %545 = vmatprep.subr.mxu0 0.0
        %546 = vmatpush2.msra.mxu0 0.0
        %547 = vmatprep.mubr.f32.mxu0 0.0
        %548 = vmatmul.mubr.f32.gmra.mxu0 %v347
        %v549 = vpop.f32.mrf.mxu0
        %v550 = vadd.f32 %v308, %v549
        %v551 = vpop.f32.mrf.mxu0
        %v552 = vadd.f32 %v308, %v551
        %553 = vmatprep.mubr.f32.mxu0 0.0
        %554 = vmatmul.mubr.f32.gmra.mxu0 %v350
        %v555 = vpop.f32.mrf.mxu0
        %v556 = vadd.f32 %v313, %v555
        %v557 = vpop.f32.mrf.mxu0
        %v558 = vadd.f32 %v313, %v557
        %559 = vmatprep.mubr.f32.mxu0 0.0
        %560 = vmatmul.mubr.f32.gmra.mxu0 %v353
        %v561 = vpop.f32.mrf.mxu0
        %v562 = vadd.f32 %v318, %v561
        %v563 = vpop.f32.mrf.mxu0
        %v564 = vadd.f32 %v318, %v563
        %565 = vmatprep.mubr.f32.mxu0 0.0
        %566 = vmatmul.mubr.f32.gmra.mxu0 %v356
        %v567 = vpop.f32.mrf.mxu0
        %v568 = vadd.f32 %v323, %v567
        %v569 = vpop.f32.mrf.mxu0
        %v570 = vadd.f32 %v323, %v569
        %571 = vmatprep.mubr.f32.mxu0 0.0
        %572 = vmatmul.mubr.f32.gmra.mxu0 %v359
        %v573 = vpop.f32.mrf.mxu0
        %v574 = vadd.f32 %v328, %v573
        %v575 = vpop.f32.mrf.mxu0
        %v576 = vadd.f32 %v328, %v575
        %577 = vmatprep.mubr.f32.mxu0 0.0
        %578 = vmatmul.mubr.f32.gmra.mxu0 %v362
        %v579 = vpop.f32.mrf.mxu0
        %v580 = vadd.f32 %v333, %v579
        %v581 = vpop.f32.mrf.mxu0
        %v582 = vadd.f32 %v333, %v581
        %583 = vmatprep.mubr.f32.mxu0 0.0
        %584 = vmatmul.mubr.f32.gmra.mxu0 %v365
        %v585 = vpop.f32.mrf.mxu0
        %v586 = vadd.f32 %v338, %v585
        %v587 = vpop.f32.mrf.mxu0
        %v588 = vadd.f32 %v338, %v587
        %589 = vmatprep.mubr.f32.mxu0 0.0
        %590 = vmatmul.mubr.f32.gmra.mxu0 %v368
        %v591 = vpop.f32.mrf.mxu0
        %v592 = vadd.f32 %v343, %v591
        %v593 = vpop.f32.mrf.mxu0
        %v594 = vadd.f32 %v343, %v593
        %595 = vdwg.mxu0
        %596 = vmatprep.subr.mxu0 0.0
        %597 = vmatpush1.msra.mxu0 0.0
        %598 = vmatprep.subr.mxu0 0.0
        %599 = vmatpush1.msra.mxu0 0.0
        %600 = vmatprep.subr.mxu0 0.0
        %601 = vmatpush1.msra.mxu0 0.0
        %602 = vmatprep.subr.mxu0 0.0
        %603 = vmatpush1.msra.mxu0 0.0
        %604 = vmatprep.subr.mxu0 0.0
        %605 = vmatpush1.msra.mxu0 0.0
        %606 = vmatprep.subr.mxu0 0.0
        %607 = vmatpush1.msra.mxu0 0.0
        %608 = vmatprep.subr.mxu0 0.0
        %609 = vmatpush1.msra.mxu0 0.0
        %610 = vmatprep.subr.mxu0 0.0
        %611 = vmatpush1.msra.mxu0 0.0
        %612 = vmatprep.subr.mxu0 0.0
        %613 = vmatpush1.msra.mxu0 0.0
        %614 = vmatprep.subr.mxu0 0.0
        %615 = vmatpush1.msra.mxu0 0.0
        %616 = vmatprep.subr.mxu0 0.0
        %617 = vmatpush1.msra.mxu0 0.0
        %618 = vmatprep.subr.mxu0 0.0
        %619 = vmatpush1.msra.mxu0 0.0
        %620 = vmatprep.subr.mxu0 %v286
        %621 = vmatpush1.msra.mxu0 %v285
        %622 = vmatprep.subr.mxu0 %v278
        %623 = vmatpush1.msra.mxu0 %v277
        %624 = vmatprep.subr.mxu0 %v270
        %625 = vmatpush1.msra.mxu0 %v269
        %626 = vmatprep.subr.mxu0 %v262
        %627 = vmatpush1.msra.mxu0 %v261
        %628 = vmatprep.subr.mxu0 0.0
        %629 = vmatpush2.msra.mxu0 0.0
        %630 = vmatprep.subr.mxu0 0.0
        %631 = vmatpush2.msra.mxu0 0.0
        %632 = vmatprep.subr.mxu0 0.0
        %633 = vmatpush2.msra.mxu0 0.0
        %634 = vmatprep.subr.mxu0 0.0
        %635 = vmatpush2.msra.mxu0 0.0
        %636 = vmatprep.subr.mxu0 0.0
        %637 = vmatpush2.msra.mxu0 0.0
        %638 = vmatprep.subr.mxu0 0.0
        %639 = vmatpush2.msra.mxu0 0.0
        %640 = vmatprep.subr.mxu0 0.0
        %641 = vmatpush2.msra.mxu0 0.0
        %642 = vmatprep.subr.mxu0 0.0
        %643 = vmatpush2.msra.mxu0 0.0
        %644 = vmatprep.subr.mxu0 0.0
        %645 = vmatpush2.msra.mxu0 0.0
        %646 = vmatprep.subr.mxu0 0.0
        %647 = vmatpush2.msra.mxu0 0.0
        %648 = vmatprep.subr.mxu0 0.0
        %649 = vmatpush2.msra.mxu0 0.0
        %650 = vmatprep.subr.mxu0 0.0
        %651 = vmatpush2.msra.mxu0 0.0
        %652 = vmatprep.subr.mxu0 0.0
        %653 = vmatpush2.msra.mxu0 0.0
        %654 = vmatprep.subr.mxu0 0.0
        %655 = vmatpush2.msra.mxu0 0.0
        %656 = vmatprep.subr.mxu0 0.0
        %657 = vmatpush2.msra.mxu0 0.0
        %658 = vmatprep.subr.mxu0 0.0
        %659 = vmatpush2.msra.mxu0 0.0
        %660 = vmatprep.mubr.f32.mxu0 0.0
        %661 = vmatmul.mubr.f32.gmra.mxu0 %v347
        %v662 = vpop.f32.mrf.mxu0
        %v663 = vadd.f32 %v308, %v662
        %v664 = vpop.f32.mrf.mxu0
        %v665 = vadd.f32 %v308, %v664
        %666 = vmatprep.mubr.f32.mxu0 0.0
        %667 = vmatmul.mubr.f32.gmra.mxu0 %v350
        %v668 = vpop.f32.mrf.mxu0
        %v669 = vadd.f32 %v313, %v668
        %v670 = vpop.f32.mrf.mxu0
        %v671 = vadd.f32 %v313, %v670
        %672 = vmatprep.mubr.f32.mxu0 0.0
        %673 = vmatmul.mubr.f32.gmra.mxu0 %v353
        %v674 = vpop.f32.mrf.mxu0
        %v675 = vadd.f32 %v318, %v674
        %v676 = vpop.f32.mrf.mxu0
        %v677 = vadd.f32 %v318, %v676
        %678 = vmatprep.mubr.f32.mxu0 0.0
        %679 = vmatmul.mubr.f32.gmra.mxu0 %v356
        %v680 = vpop.f32.mrf.mxu0
        %v681 = vadd.f32 %v323, %v680
        %v682 = vpop.f32.mrf.mxu0
        %v683 = vadd.f32 %v323, %v682
        %684 = vmatprep.mubr.f32.mxu0 0.0
        %685 = vmatmul.mubr.f32.gmra.mxu0 %v359
        %v686 = vpop.f32.mrf.mxu0
        %v687 = vadd.f32 %v328, %v686
        %v688 = vpop.f32.mrf.mxu0
        %v689 = vadd.f32 %v328, %v688
        %690 = vmatprep.mubr.f32.mxu0 0.0
        %691 = vmatmul.mubr.f32.gmra.mxu0 %v362
        %v692 = vpop.f32.mrf.mxu0
        %v693 = vadd.f32 %v333, %v692
        %v694 = vpop.f32.mrf.mxu0
        %v695 = vadd.f32 %v333, %v694
        %696 = vmatprep.mubr.f32.mxu0 0.0
        %697 = vmatmul.mubr.f32.gmra.mxu0 %v365
        %v698 = vpop.f32.mrf.mxu0
        %v699 = vadd.f32 %v338, %v698
        %v700 = vpop.f32.mrf.mxu0
        %v701 = vadd.f32 %v338, %v700
        %702 = vmatprep.mubr.f32.mxu0 0.0
        %703 = vmatmul.mubr.f32.gmra.mxu0 %v368
        %v704 = vpop.f32.mrf.mxu0
        %v705 = vadd.f32 %v343, %v704
        %v706 = vpop.f32.mrf.mxu0
        %v707 = vadd.f32 %v343, %v706
        %708 = vdwg.mxu0
        %709 = vmatprep.subr.mxu0 0.0
        %710 = vmatpush1.msra.mxu0 0.0
        %711 = vmatprep.subr.mxu0 0.0
        %712 = vmatpush1.msra.mxu0 0.0
        %713 = vmatprep.subr.mxu0 0.0
        %714 = vmatpush1.msra.mxu0 0.0
        %715 = vmatprep.subr.mxu0 0.0
        %716 = vmatpush1.msra.mxu0 0.0
        %717 = vmatprep.subr.mxu0 0.0
        %718 = vmatpush1.msra.mxu0 0.0
        %719 = vmatprep.subr.mxu0 0.0
        %720 = vmatpush1.msra.mxu0 0.0
        %721 = vmatprep.subr.mxu0 0.0
        %722 = vmatpush1.msra.mxu0 0.0
        %723 = vmatprep.subr.mxu0 0.0
        %724 = vmatpush1.msra.mxu0 0.0
        %725 = vmatprep.subr.mxu0 0.0
        %726 = vmatpush1.msra.mxu0 0.0
        %727 = vmatprep.subr.mxu0 0.0
        %728 = vmatpush1.msra.mxu0 0.0
        %729 = vmatprep.subr.mxu0 0.0
        %730 = vmatpush1.msra.mxu0 0.0
        %731 = vmatprep.subr.mxu0 0.0
        %732 = vmatpush1.msra.mxu0 0.0
        %733 = vmatprep.subr.mxu0 %v288
        %734 = vmatpush1.msra.mxu0 %v287
        %735 = vmatprep.subr.mxu0 %v280
        %736 = vmatpush1.msra.mxu0 %v279
        %737 = vmatprep.subr.mxu0 %v272
        %738 = vmatpush1.msra.mxu0 %v271
        %739 = vmatprep.subr.mxu0 %v264
        %740 = vmatpush1.msra.mxu0 %v263
        %741 = vmatprep.subr.mxu0 0.0
        %742 = vmatpush2.msra.mxu0 0.0
        %743 = vmatprep.subr.mxu0 0.0
        %744 = vmatpush2.msra.mxu0 0.0
        %745 = vmatprep.subr.mxu0 0.0
        %746 = vmatpush2.msra.mxu0 0.0
        %747 = vmatprep.subr.mxu0 0.0
        %748 = vmatpush2.msra.mxu0 0.0
        %749 = vmatprep.subr.mxu0 0.0
        %750 = vmatpush2.msra.mxu0 0.0
        %751 = vmatprep.subr.mxu0 0.0
        %752 = vmatpush2.msra.mxu0 0.0
        %753 = vmatprep.subr.mxu0 0.0
        %754 = vmatpush2.msra.mxu0 0.0
        %755 = vmatprep.subr.mxu0 0.0
        %756 = vmatpush2.msra.mxu0 0.0
        %757 = vmatprep.subr.mxu0 0.0
        %758 = vmatpush2.msra.mxu0 0.0
        %759 = vmatprep.subr.mxu0 0.0
        %760 = vmatpush2.msra.mxu0 0.0
        %761 = vmatprep.subr.mxu0 0.0
        %762 = vmatpush2.msra.mxu0 0.0
        %763 = vmatprep.subr.mxu0 0.0
        %764 = vmatpush2.msra.mxu0 0.0
        %765 = vmatprep.subr.mxu0 0.0
        %766 = vmatpush2.msra.mxu0 0.0
        %767 = vmatprep.subr.mxu0 0.0
        %768 = vmatpush2.msra.mxu0 0.0
        %769 = vmatprep.subr.mxu0 0.0
        %770 = vmatpush2.msra.mxu0 0.0
        %771 = vmatprep.subr.mxu0 0.0
        %772 = vmatpush2.msra.mxu0 0.0
        %773 = vmatprep.mubr.f32.mxu0 0.0
        %774 = vmatmul.mubr.f32.gmra.mxu0 %v347
        %v775 = vpop.f32.mrf.mxu0
        %v776 = vadd.f32 %v308, %v775
        %v777 = vpop.f32.mrf.mxu0
        %v778 = vadd.f32 %v308, %v777
        %779 = vmatprep.mubr.f32.mxu0 0.0
        %780 = vmatmul.mubr.f32.gmra.mxu0 %v350
        %v781 = vpop.f32.mrf.mxu0
        %v782 = vadd.f32 %v313, %v781
        %v783 = vpop.f32.mrf.mxu0
        %v784 = vadd.f32 %v313, %v783
        %785 = vmatprep.mubr.f32.mxu0 0.0
        %786 = vmatmul.mubr.f32.gmra.mxu0 %v353
        %v787 = vpop.f32.mrf.mxu0
        %v788 = vadd.f32 %v318, %v787
        %v789 = vpop.f32.mrf.mxu0
        %v790 = vadd.f32 %v318, %v789
        %791 = vmatprep.mubr.f32.mxu0 0.0
        %792 = vmatmul.mubr.f32.gmra.mxu0 %v356
        %v793 = vpop.f32.mrf.mxu0
        %v794 = vadd.f32 %v323, %v793
        %v795 = vpop.f32.mrf.mxu0
        %v796 = vadd.f32 %v323, %v795
        %797 = vmatprep.mubr.f32.mxu0 0.0
        %798 = vmatmul.mubr.f32.gmra.mxu0 %v359
        %v799 = vpop.f32.mrf.mxu0
        %v800 = vadd.f32 %v328, %v799
        %v801 = vpop.f32.mrf.mxu0
        %v802 = vadd.f32 %v328, %v801
        %803 = vmatprep.mubr.f32.mxu0 0.0
        %804 = vmatmul.mubr.f32.gmra.mxu0 %v362
        %v805 = vpop.f32.mrf.mxu0
        %v806 = vadd.f32 %v333, %v805
        %v807 = vpop.f32.mrf.mxu0
        %v808 = vadd.f32 %v333, %v807
        %809 = vmatprep.mubr.f32.mxu0 0.0
        %810 = vmatmul.mubr.f32.gmra.mxu0 %v365
        %v811 = vpop.f32.mrf.mxu0
        %v812 = vadd.f32 %v338, %v811
        %v813 = vpop.f32.mrf.mxu0
        %v814 = vadd.f32 %v338, %v813
        %815 = vmatprep.mubr.f32.mxu0 0.0
        %816 = vmatmul.mubr.f32.gmra.mxu0 %v368
        %v817 = vpop.f32.mrf.mxu0
        %v818 = vadd.f32 %v343, %v817
        %v819 = vpop.f32.mrf.mxu0
        %v820 = vadd.f32 %v343, %v819
        %821 = vdwg.mxu0
        %v822 = vxor.u32 %v461, 2147483648
        %v823 = vxor.u32 %v463, 2147483648
        %v824 = vxor.u32 %v574, 2147483648
        %v825 = vxor.u32 %v576, 2147483648
        %v826 = vxor.u32 %v687, 2147483648
        %v827 = vxor.u32 %v689, 2147483648
        %v828 = vxor.u32 %v800, 2147483648
        %v829 = vxor.u32 %v802, 2147483648
        %v830 = vxor.u32 %v467, 2147483648
        %v831 = vxor.u32 %v469, 2147483648
        %v832 = vxor.u32 %v580, 2147483648
        %v833 = vxor.u32 %v582, 2147483648
        %v834 = vxor.u32 %v693, 2147483648
        %v835 = vxor.u32 %v695, 2147483648
        %v836 = vxor.u32 %v806, 2147483648
        %v837 = vxor.u32 %v808, 2147483648
        %v838 = vxor.u32 %v473, 2147483648
        %v839 = vxor.u32 %v475, 2147483648
        %v840 = vxor.u32 %v586, 2147483648
        %v841 = vxor.u32 %v588, 2147483648
        %v842 = vxor.u32 %v699, 2147483648
        %v843 = vxor.u32 %v701, 2147483648
        %v844 = vxor.u32 %v812, 2147483648
        %v845 = vxor.u32 %v814, 2147483648
        %v846 = vxor.u32 %v479, 2147483648
        %v847 = vxor.u32 %v481, 2147483648
        %v848 = vxor.u32 %v592, 2147483648
        %v849 = vxor.u32 %v594, 2147483648
        %v850 = vxor.u32 %v705, 2147483648
        %v851 = vxor.u32 %v707, 2147483648
        %v852 = vxor.u32 %v818, 2147483648
        %v853 = vxor.u32 %v820, 2147483648
        %v854 = vmul.f32 %v822, 1.442695
        %v855 = vpow.pop %v854
        %v856 = vmul.f32 %v823, 1.442695
        %v857 = vpow.pop %v856
        %v858 = vmul.f32 %v824, 1.442695
        %v859 = vpow.pop %v858
        %v860 = vmul.f32 %v825, 1.442695
        %v861 = vpow.pop %v860
        %v862 = vmul.f32 %v826, 1.442695
        %v863 = vpow.pop %v862
        %v864 = vmul.f32 %v827, 1.442695
        %v865 = vpow.pop %v864
        %v866 = vmul.f32 %v828, 1.442695
        %v867 = vpow.pop %v866
        %v868 = vmul.f32 %v829, 1.442695
        %v869 = vpow.pop %v868
        %v870 = vmul.f32 %v830, 1.442695
        %v871 = vpow.pop %v870
        %v872 = vmul.f32 %v831, 1.442695
        %v873 = vpow.pop %v872
        %v874 = vmul.f32 %v832, 1.442695
        %v875 = vpow.pop %v874
        %v876 = vmul.f32 %v833, 1.442695
        %v877 = vpow.pop %v876
        %v878 = vmul.f32 %v834, 1.442695
        %v879 = vpow.pop %v878
        %v880 = vmul.f32 %v835, 1.442695
        %v881 = vpow.pop %v880
        %v882 = vmul.f32 %v836, 1.442695
        %v883 = vpow.pop %v882
        %v884 = vmul.f32 %v837, 1.442695
        %v885 = vpow.pop %v884
        %v886 = vmul.f32 %v838, 1.442695
        %v887 = vpow.pop %v886
        %v888 = vmul.f32 %v839, 1.442695
        %v889 = vpow.pop %v888
        %v890 = vmul.f32 %v840, 1.442695
        %v891 = vpow.pop %v890
        %v892 = vmul.f32 %v841, 1.442695
        %v893 = vpow.pop %v892
        %v894 = vmul.f32 %v842, 1.442695
        %v895 = vpow.pop %v894
        %v896 = vmul.f32 %v843, 1.442695
        %v897 = vpow.pop %v896
        %v898 = vmul.f32 %v844, 1.442695
        %v899 = vpow.pop %v898
        %v900 = vmul.f32 %v845, 1.442695
        %v901 = vpow.pop %v900
        %v902 = vmul.f32 %v846, 1.442695
        %v903 = vpow.pop %v902
        %v904 = vmul.f32 %v847, 1.442695
        %v905 = vpow.pop %v904
        %v906 = vmul.f32 %v848, 1.442695
        %v907 = vpow.pop %v906
        %v908 = vmul.f32 %v849, 1.442695
        %v909 = vpow.pop %v908
        %v910 = vmul.f32 %v850, 1.442695
        %v911 = vpow.pop %v910
        %v912 = vmul.f32 %v851, 1.442695
        %v913 = vpow.pop %v912
        %v914 = vmul.f32 %v852, 1.442695
        %v915 = vpow.pop %v914
        %v916 = vmul.f32 %v853, 1.442695
        %v917 = vpow.pop %v916
        %v918 = vadd.f32 %v855, 1.0
        %v919 = vadd.f32 %v857, 1.0
        %v920 = vadd.f32 %v859, 1.0
        %v921 = vadd.f32 %v861, 1.0
        %v922 = vadd.f32 %v863, 1.0
        %v923 = vadd.f32 %v865, 1.0
        %v924 = vadd.f32 %v867, 1.0
        %v925 = vadd.f32 %v869, 1.0
        %v926 = vadd.f32 %v871, 1.0
        %v927 = vadd.f32 %v873, 1.0
        %v928 = vadd.f32 %v875, 1.0
        %v929 = vadd.f32 %v877, 1.0
        %v930 = vadd.f32 %v879, 1.0
        %v931 = vadd.f32 %v881, 1.0
        %v932 = vadd.f32 %v883, 1.0
        %v933 = vadd.f32 %v885, 1.0
        %v934 = vadd.f32 %v887, 1.0
        %v935 = vadd.f32 %v889, 1.0
        %v936 = vadd.f32 %v891, 1.0
        %v937 = vadd.f32 %v893, 1.0
        %v938 = vadd.f32 %v895, 1.0
        %v939 = vadd.f32 %v897, 1.0
        %v940 = vadd.f32 %v899, 1.0
        %v941 = vadd.f32 %v901, 1.0
        %v942 = vadd.f32 %v903, 1.0
        %v943 = vadd.f32 %v905, 1.0
        %v944 = vadd.f32 %v907, 1.0
        %v945 = vadd.f32 %v909, 1.0
        %v946 = vadd.f32 %v911, 1.0
        %v947 = vadd.f32 %v913, 1.0
        %v948 = vadd.f32 %v915, 1.0
        %v949 = vadd.f32 %v917, 1.0
        %v950 = vrcp.pop %v918
        %v951 = vmul.f32 1.0, %v950
        %v952 = vrcp.pop %v919
        %v953 = vmul.f32 1.0, %v952
        %v954 = vrcp.pop %v920
        %v955 = vmul.f32 1.0, %v954
        %v956 = vrcp.pop %v921
        %v957 = vmul.f32 1.0, %v956
        %v958 = vrcp.pop %v922
        %v959 = vmul.f32 1.0, %v958
        %v960 = vrcp.pop %v923
        %v961 = vmul.f32 1.0, %v960
        %v962 = vrcp.pop %v924
        %v963 = vmul.f32 1.0, %v962
        %v964 = vrcp.pop %v925
        %v965 = vmul.f32 1.0, %v964
        %v966 = vrcp.pop %v926
        %v967 = vmul.f32 1.0, %v966
        %v968 = vrcp.pop %v927
        %v969 = vmul.f32 1.0, %v968
        %v970 = vrcp.pop %v928
        %v971 = vmul.f32 1.0, %v970
        %v972 = vrcp.pop %v929
        %v973 = vmul.f32 1.0, %v972
        %v974 = vrcp.pop %v930
        %v975 = vmul.f32 1.0, %v974
        %v976 = vrcp.pop %v931
        %v977 = vmul.f32 1.0, %v976
        %v978 = vrcp.pop %v932
        %v979 = vmul.f32 1.0, %v978
        %v980 = vrcp.pop %v933
        %v981 = vmul.f32 1.0, %v980
        %v982 = vrcp.pop %v934
        %v983 = vmul.f32 1.0, %v982
        %v984 = vrcp.pop %v935
        %v985 = vmul.f32 1.0, %v984
        %v986 = vrcp.pop %v936
        %v987 = vmul.f32 1.0, %v986
        %v988 = vrcp.pop %v937
        %v989 = vmul.f32 1.0, %v988
        %v990 = vrcp.pop %v938
        %v991 = vmul.f32 1.0, %v990
        %v992 = vrcp.pop %v939
        %v993 = vmul.f32 1.0, %v992
        %v994 = vrcp.pop %v940
        %v995 = vmul.f32 1.0, %v994
        %v996 = vrcp.pop %v941
        %v997 = vmul.f32 1.0, %v996
        %v998 = vrcp.pop %v942
        %v999 = vmul.f32 1.0, %v998
        %v1000 = vrcp.pop %v943
        %v1001 = vmul.f32 1.0, %v1000
        %v1002 = vrcp.pop %v944
        %v1003 = vmul.f32 1.0, %v1002
        %v1004 = vrcp.pop %v945
        %v1005 = vmul.f32 1.0, %v1004
        %v1006 = vrcp.pop %v946
        %v1007 = vmul.f32 1.0, %v1006
        %v1008 = vrcp.pop %v947
        %v1009 = vmul.f32 1.0, %v1008
        %v1010 = vrcp.pop %v948
        %v1011 = vmul.f32 1.0, %v1010
        %v1012 = vrcp.pop %v949
        %v1013 = vmul.f32 1.0, %v1012
        %v1014 = vmul.f32 %v437, %v951
        %v1015 = vmul.f32 %v439, %v953
        %v1016 = vmul.f32 %v550, %v955
        %v1017 = vmul.f32 %v552, %v957
        %v1018 = vmul.f32 %v663, %v959
        %v1019 = vmul.f32 %v665, %v961
        %v1020 = vmul.f32 %v776, %v963
        %v1021 = vmul.f32 %v778, %v965
        %v1022 = vmul.f32 %v443, %v967
        %v1023 = vmul.f32 %v445, %v969
        %v1024 = vmul.f32 %v556, %v971
        %v1025 = vmul.f32 %v558, %v973
        %v1026 = vmul.f32 %v669, %v975
        %v1027 = vmul.f32 %v671, %v977
        %v1028 = vmul.f32 %v782, %v979
        %v1029 = vmul.f32 %v784, %v981
        %v1030 = vmul.f32 %v449, %v983
        %v1031 = vmul.f32 %v451, %v985
        %v1032 = vmul.f32 %v562, %v987
        %v1033 = vmul.f32 %v564, %v989
        %v1034 = vmul.f32 %v675, %v991
        %v1035 = vmul.f32 %v677, %v993
        %v1036 = vmul.f32 %v788, %v995
        %v1037 = vmul.f32 %v790, %v997
        %v1038 = vmul.f32 %v455, %v999
        %v1039 = vmul.f32 %v457, %v1001
        %v1040 = vmul.f32 %v568, %v1003
        %v1041 = vmul.f32 %v570, %v1005
        %v1042 = vmul.f32 %v681, %v1007
        %v1043 = vmul.f32 %v683, %v1009
        %v1044 = vmul.f32 %v794, %v1011
        %v1045 = vmul.f32 %v796, %v1013
        %v1046 = vadd.f32 %v1014, %v1022
        %v1047 = vadd.f32 %v1046, %v1030
        %v1048 = vadd.f32 %v1047, %v1038
        %v1049 = vrot.slane %v1048, 4
        %v1050 = vadd.f32 %v1048, %v1049
        %v1051 = vrot.slane %v1050, 2
        %v1052 = vadd.f32 %v1050, %v1051
        %v1053 = vrot.slane %v1052, 1
        %v1054 = vadd.f32 %v1052, %v1053
        %v1055 = vadd.f32 %v1015, %v1023
        %v1056 = vadd.f32 %v1055, %v1031
        %v1057 = vadd.f32 %v1056, %v1039
        %v1058 = vrot.slane %v1057, 4
        %v1059 = vadd.f32 %v1057, %v1058
        %v1060 = vrot.slane %v1059, 2
        %v1061 = vadd.f32 %v1059, %v1060
        %v1062 = vrot.slane %v1061, 1
        %v1063 = vadd.f32 %v1061, %v1062
        %v1064 = vadd.f32 %v1016, %v1024
        %v1065 = vadd.f32 %v1064, %v1032
        %v1066 = vadd.f32 %v1065, %v1040
        %v1067 = vrot.slane %v1066, 4
        %v1068 = vadd.f32 %v1066, %v1067
        %v1069 = vrot.slane %v1068, 2
        %v1070 = vadd.f32 %v1068, %v1069
        %v1071 = vrot.slane %v1070, 1
        %v1072 = vadd.f32 %v1070, %v1071
        %v1073 = vadd.f32 %v1017, %v1025
        %v1074 = vadd.f32 %v1073, %v1033
        %v1075 = vadd.f32 %v1074, %v1041
        %v1076 = vrot.slane %v1075, 4
        %v1077 = vadd.f32 %v1075, %v1076
        %v1078 = vrot.slane %v1077, 2
        %v1079 = vadd.f32 %v1077, %v1078
        %v1080 = vrot.slane %v1079, 1
        %v1081 = vadd.f32 %v1079, %v1080
        %v1082 = vadd.f32 %v1018, %v1026
        %v1083 = vadd.f32 %v1082, %v1034
        %v1084 = vadd.f32 %v1083, %v1042
        %v1085 = vrot.slane %v1084, 4
        %v1086 = vadd.f32 %v1084, %v1085
        %v1087 = vrot.slane %v1086, 2
        %v1088 = vadd.f32 %v1086, %v1087
        %v1089 = vrot.slane %v1088, 1
        %v1090 = vadd.f32 %v1088, %v1089
        %v1091 = vadd.f32 %v1019, %v1027
        %v1092 = vadd.f32 %v1091, %v1035
        %v1093 = vadd.f32 %v1092, %v1043
        %v1094 = vrot.slane %v1093, 4
        %v1095 = vadd.f32 %v1093, %v1094
        %v1096 = vrot.slane %v1095, 2
        %v1097 = vadd.f32 %v1095, %v1096
        %v1098 = vrot.slane %v1097, 1
        %v1099 = vadd.f32 %v1097, %v1098
        %v1100 = vadd.f32 %v1020, %v1028
        %v1101 = vadd.f32 %v1100, %v1036
        %v1102 = vadd.f32 %v1101, %v1044
        %v1103 = vrot.slane %v1102, 4
        %v1104 = vadd.f32 %v1102, %v1103
        %v1105 = vrot.slane %v1104, 2
        %v1106 = vadd.f32 %v1104, %v1105
        %v1107 = vrot.slane %v1106, 1
        %v1108 = vadd.f32 %v1106, %v1107
        %v1109 = vadd.f32 %v1021, %v1029
        %v1110 = vadd.f32 %v1109, %v1037
        %v1111 = vadd.f32 %v1110, %v1045
        %v1112 = vrot.slane %v1111, 4
        %v1113 = vadd.f32 %v1111, %v1112
        %v1114 = vrot.slane %v1113, 2
        %v1115 = vadd.f32 %v1113, %v1114
        %v1116 = vrot.slane %v1115, 1
        %v1117 = vadd.f32 %v1115, %v1116
        %s1118 = sld [smem:[#allocation2]]
        %v1119 = vstv %s1118
        %v1120 = vadd.f32 %v1054, %v1119
        %v1121 = vadd.f32 %v1063, %v1119
        %v1122 = vadd.f32 %v1072, %v1119
        %v1123 = vadd.f32 %v1081, %v1119
        %v1124 = vadd.f32 %v1090, %v1119
        %v1125 = vadd.f32 %v1099, %v1119
        %v1126 = vadd.f32 %v1108, %v1119
        %v1127 = vadd.f32 %v1117, %v1119
        %v1128 = vxor.u32 %v1120, 2147483648
        %v1129 = vxor.u32 %v1121, 2147483648
        %v1130 = vxor.u32 %v1122, 2147483648
        %v1131 = vxor.u32 %v1123, 2147483648
        %v1132 = vxor.u32 %v1124, 2147483648
        %v1133 = vxor.u32 %v1125, 2147483648
        %v1134 = vxor.u32 %v1126, 2147483648
        %v1135 = vxor.u32 %v1127, 2147483648
        %v1136 = vmul.f32 %v1128, 1.442695
        %v1137 = vpow.pop %v1136
        %v1138 = vmul.f32 %v1129, 1.442695
        %v1139 = vpow.pop %v1138
        %v1140 = vmul.f32 %v1130, 1.442695
        %v1141 = vpow.pop %v1140
        %v1142 = vmul.f32 %v1131, 1.442695
        %v1143 = vpow.pop %v1142
        %v1144 = vmul.f32 %v1132, 1.442695
        %v1145 = vpow.pop %v1144
        %v1146 = vmul.f32 %v1133, 1.442695
        %v1147 = vpow.pop %v1146
        %v1148 = vmul.f32 %v1134, 1.442695
        %v1149 = vpow.pop %v1148
        %v1150 = vmul.f32 %v1135, 1.442695
        %v1151 = vpow.pop %v1150
        %v1152 = vadd.f32 %v1137, 1.0
        %v1153 = vadd.f32 %v1139, 1.0
        %v1154 = vadd.f32 %v1141, 1.0
        %v1155 = vadd.f32 %v1143, 1.0
        %v1156 = vadd.f32 %v1145, 1.0
        %v1157 = vadd.f32 %v1147, 1.0
        %v1158 = vadd.f32 %v1149, 1.0
        %v1159 = vadd.f32 %v1151, 1.0
        %v1160 = vrcp.pop %v1152
        %v1161 = vmul.f32 1.0, %v1160
        %v1162 = vrcp.pop %v1153
        %v1163 = vmul.f32 1.0, %v1162
        %v1164 = vrcp.pop %v1154
        %v1165 = vmul.f32 1.0, %v1164
        %v1166 = vrcp.pop %v1155
        %v1167 = vmul.f32 1.0, %v1166
        %v1168 = vrcp.pop %v1156
        %v1169 = vmul.f32 1.0, %v1168
        %v1170 = vrcp.pop %v1157
        %v1171 = vmul.f32 1.0, %v1170
        %v1172 = vrcp.pop %v1158
        %v1173 = vmul.f32 1.0, %v1172
        %v1174 = vrcp.pop %v1159
        %v1175 = vmul.f32 1.0, %v1174
        %v1176 = vadd.f32 %v1161, 1.0
        %v1177 = vadd.f32 %v1163, 1.0
        %v1178 = vadd.f32 %v1165, 1.0
        %v1179 = vadd.f32 %v1167, 1.0
        %v1180 = vadd.f32 %v1169, 1.0
        %v1181 = vadd.f32 %v1171, 1.0
        %v1182 = vadd.f32 %v1173, 1.0
        %v1183 = vadd.f32 %v1175, 1.0
        %v1184 = vmul.f32 %v1176, 0.5
        %v1185 = vmul.f32 %v1177, 0.5
        %v1186 = vmul.f32 %v1178, 0.5
        %v1187 = vmul.f32 %v1179, 0.5
        %v1188 = vmul.f32 %v1180, 0.5
        %v1189 = vmul.f32 %v1181, 0.5
        %v1190 = vmul.f32 %v1182, 0.5
        %v1191 = vmul.f32 %v1183, 0.5
        %v1192 = vmul.f32 %v1184, %v257
        %v1193 = vmul.f32 %v1185, %v258
        %v1194 = vmul.f32 %v1186, %v259
        %v1195 = vmul.f32 %v1187, %v260
        %v1196 = vmul.f32 %v1188, %v261
        %v1197 = vmul.f32 %v1189, %v262
        %v1198 = vmul.f32 %v1190, %v263
        %v1199 = vmul.f32 %v1191, %v264
        %v1200 = vmul.f32 %v1184, %v265
        %v1201 = vmul.f32 %v1185, %v266
        %v1202 = vmul.f32 %v1186, %v267
        %v1203 = vmul.f32 %v1187, %v268
        %v1204 = vmul.f32 %v1188, %v269
        %v1205 = vmul.f32 %v1189, %v270
        %v1206 = vmul.f32 %v1190, %v271
        %v1207 = vmul.f32 %v1191, %v272
        %v1208 = vmul.f32 %v1184, %v273
        %v1209 = vmul.f32 %v1185, %v274
        %v1210 = vmul.f32 %v1186, %v275
        %v1211 = vmul.f32 %v1187, %v276
        %v1212 = vmul.f32 %v1188, %v277
        %v1213 = vmul.f32 %v1189, %v278
        %v1214 = vmul.f32 %v1190, %v279
        %v1215 = vmul.f32 %v1191, %v280
        %v1216 = vmul.f32 %v1184, %v281
        %v1217 = vmul.f32 %v1185, %v282
        %v1218 = vmul.f32 %v1186, %v283
        %v1219 = vmul.f32 %v1187, %v284
        %v1220 = vmul.f32 %v1188, %v285
        %v1221 = vmul.f32 %v1189, %v286
        %v1222 = vmul.f32 %v1190, %v287
        %v1223 = vmul.f32 %v1191, %v288
        %1224 = vst [vmem:[%s249] sm:$0xff] %v1192
        %1225 = vst [vmem:[%s249 + $0x8] sm:$0xff] %v1193
        %1226 = vst [vmem:[%s249 + $0x10] sm:$0xff] %v1194
        %1227 = vst [vmem:[%s249 + $0x18] sm:$0xff] %v1195
        %1228 = vst [vmem:[%s249 + $0x20] sm:$0xff] %v1196
        %1229 = vst [vmem:[%s249 + $0x28] sm:$0xff] %v1197
        %1230 = vst [vmem:[%s249 + $0x30] sm:$0xff] %v1198
        %1231 = vst [vmem:[%s249 + $0x38] sm:$0xff] %v1199
        %1232 = vst [vmem:[%s249 + $0x40] sm:$0xff] %v1200
        %1233 = vst [vmem:[%s249 + $0x48] sm:$0xff] %v1201
        %1234 = vst [vmem:[%s249 + $0x50] sm:$0xff] %v1202
        %1235 = vst [vmem:[%s249 + $0x58] sm:$0xff] %v1203
        %1236 = vst [vmem:[%s249 + $0x60] sm:$0xff] %v1204
        %1237 = vst [vmem:[%s249 + $0x68] sm:$0xff] %v1205
        %1238 = vst [vmem:[%s249 + $0x70] sm:$0xff] %v1206
        %1239 = vst [vmem:[%s249 + $0x78] sm:$0xff] %v1207
        %1240 = vst [vmem:[%s249 + $0x80] sm:$0xff] %v1208
        %1241 = vst [vmem:[%s249 + $0x88] sm:$0xff] %v1209
        %1242 = vst [vmem:[%s249 + $0x90] sm:$0xff] %v1210
        %1243 = vst [vmem:[%s249 + $0x98] sm:$0xff] %v1211
        %1244 = vst [vmem:[%s249 + $0xa0] sm:$0xff] %v1212
        %1245 = vst [vmem:[%s249 + $0xa8] sm:$0xff] %v1213
        %1246 = vst [vmem:[%s249 + $0xb0] sm:$0xff] %v1214
        %1247 = vst [vmem:[%s249 + $0xb8] sm:$0xff] %v1215
        %1248 = vst [vmem:[%s249 + $0xc0] sm:$0xff] %v1216
        %1249 = vst [vmem:[%s249 + $0xc8] sm:$0xff] %v1217
        %1250 = vst [vmem:[%s249 + $0xd0] sm:$0xff] %v1218
        %1251 = vst [vmem:[%s249 + $0xd8] sm:$0xff] %v1219
        %1252 = vst [vmem:[%s249 + $0xe0] sm:$0xff] %v1220
        %1253 = vst [vmem:[%s249 + $0xe8] sm:$0xff] %v1221
        %1254 = vst [vmem:[%s249 + $0xf0] sm:$0xff] %v1222
        %1255 = vst [vmem:[%s249 + $0xf8] sm:$0xff] %v1223
        %s1256 = sand.u32 %s140, 1
        %s1257 = scalar_lea.sflag [#allocation5], %s1256
        %s1258 = sand.u32 %s140, 1
        %s1259 = smul.addr %s1258, 256
        %s1260 = scalar_lea.vmem [#allocation6], %s1259
        // Predicated region
        $region41: #{tpu_custom_call.1} parent=35 // pred_check
          %p1261 = pneg %p150
        $region42: #{tpu_custom_call.1} parent=35 // pred_check_branch
          %1263 = sbr.rel (%p1261) target = $region44
        $region43: #{tpu_custom_call.1} parent=35 // pred_region
          %s1264 = smul.u32 8, %s27
          %s1266 = ssub.s32 4096, 4096
          %1267 = vsyncadd %s1257, %s1266
          %s1268 = smul.addr %s26, 32
          %s1269 = sadd.s32 %s1264, %s1268
          %s1270 = smul.addr %s1269, 128
          %s1271 = scalar_lea.hbm %s4, %s1270
          %s1272 = sshll.u32 %s1260, 4
          %s1273 = int_to_ptr.vmem [resolvable:$true] %s1272
          %1278 = dma.vmem_to_hbm [thread:$0]  %s1273, 4096, %s1271, %s1257, 1024, 1024, 64
        $region44: #{tpu_custom_call.1} parent=35 // pred_fallthru
          _
      $region36: #{tpu_custom_call.1} parent=5 // pred_fallthru
        _
      %p1279 = scmp.le.s32.totalorder 2, %s17
      // Predicated region
      $region45: #{tpu_custom_call.1} parent=5 // pred_check
        %p1280 = pneg %p1279
      $region46: #{tpu_custom_call.1} parent=5 // pred_check_branch
        %1282 = sbr.rel (%p1280) target = $region48
      $region47: #{tpu_custom_call.1} parent=5 // pred_region
        %s1283 = ssub.s32 %s17, 2
        // Predicated region
        $region49: #{tpu_custom_call.1} parent=47 // pred_check
          %p1284 = pneg %p156
        $region50: #{tpu_custom_call.1} parent=47 // pred_check_branch
          %1286 = sbr.rel (%p1284) target = $region52
        $region51: #{tpu_custom_call.1} parent=47 // pred_region
          %s1287 = sand.u32 %s141, 1
          %s1288 = scalar_lea.sflag [#allocation5], %s1287
          %s1289 = sand.u32 %s141, 1
          %s1290 = smul.addr %s1289, 256
          %s1291 = scalar_lea.vmem [#allocation6], %s1290
          %1292 = dma.done %s1288, 4096
        $region52: #{tpu_custom_call.1} parent=47 // pred_fallthru
          _
      $region48: #{tpu_custom_call.1} parent=5 // pred_fallthru
        _
    $region6: #{tpu_custom_call.1} parent=1 // loop_footer
      %s21 = sadd.s32 1, %s17
    $region7: #{tpu_custom_call.1} parent=1 // loop_footer_branch
      %16 = sbr.rel target = $region3
    $region8: #{tpu_custom_call.1} parent=1 // loop_exit
      _
    %1293 = vsyncpa [#allocation4], 1
    %s1294 = scalar_lea.sflag [#allocation4], 1
    %1295 = vsyncpa %s1294, 1
    %1296 = vsyncpa [#allocation5], 1
    %s1297 = scalar_lea.sflag [#allocation5], 1
    %1298 = vsyncpa %s1297, 1

</llo_original>
